<compile_context>
chip_gen: v5e
topology: v5e:2x2
jax: 0.10.0
libtpu: 0.0.40
codegen_flags: <defaults>
</compile_context>

<pallas_src>
import functools

import jax
import jax.numpy as jnp
from jax.experimental import pallas as pl
from jax.experimental.pallas import tpu as pltpu


_LANE = 128                      # lane width: pad every feature axis to this
_MAX_TILE = 512                  # row/col tile of the dense (A+I) stream
_VMEM_LIMIT = 48 * 1024 * 1024   # explicit scoped-VMEM budget (safe on v5e/v6e/v7x)


def _round_up(x, m):
    return ((x + m - 1) // m) * m


# ---------------------------------------------------------------------------
# Kernel 1: projection  Y = D^{-1/2} * (X @ W)   (bf16 in, f32 acc, bf16 out)
# ---------------------------------------------------------------------------
def _project_kernel(x_ref, w_ref, d_ref, y_ref):
    xw = jnp.dot(x_ref[...], w_ref[...], preferred_element_type=jnp.float32)
    y_ref[...] = (xw * d_ref[...]).astype(y_ref.dtype)


def _project(x_bf16, w_bf16, dinv, tile):
    npad, cpad = x_bf16.shape
    fpad = w_bf16.shape[1]
    return pl.pallas_call(
        _project_kernel,
        out_shape=jax.ShapeDtypeStruct((npad, fpad), jnp.bfloat16),
        grid=(npad // tile,),
        in_specs=[
            pl.BlockSpec((tile, cpad), lambda i: (i, 0)),
            pl.BlockSpec((cpad, fpad), lambda i: (0, 0)),   # W stays VMEM-resident
            pl.BlockSpec((tile, 1), lambda i: (i, 0)),
        ],
        out_specs=pl.BlockSpec((tile, fpad), lambda i: (i, 0)),
        compiler_params=pltpu.CompilerParams(
            dimension_semantics=("parallel",),
            vmem_limit_bytes=_VMEM_LIMIT),
        cost_estimate=pl.CostEstimate(
            flops=2 * npad * cpad * fpad,
            transcendentals=0,
            bytes_accessed=npad * cpad * 2 + cpad * fpad * 2 + npad * fpad * 2),
    )(x_bf16, w_bf16, dinv)


# ---------------------------------------------------------------------------
# Kernel 2: aggregation  O = D^{-1/2} * ((A+I) @ Y) + b   [+ optional relu]
#   grid = (row tiles "parallel", source/K tiles "arbitrary" (last, reduction))
# ---------------------------------------------------------------------------
def _aggregate_kernel(a_ref, y_ref, d_ref, b_ref, o_ref, acc_ref, *, relu):
    k = pl.program_id(1)

    @pl.when(k == 0)
    def _():
        acc_ref[...] = jnp.zeros_like(acc_ref)

    acc_ref[...] += jnp.dot(a_ref[...], y_ref[...],
                            preferred_element_type=jnp.float32)

    @pl.when(k == pl.num_programs(1) - 1)
    def _():
        res = acc_ref[...] * d_ref[...] + b_ref[...]   # bias after aggregation (PyG)
        if relu:
            res = jnp.maximum(res, 0.0)
        o_ref[...] = res.astype(o_ref.dtype)


def _aggregate(a_bf16, y_bf16, dinv, bias, *, relu, out_dtype, tile):
    npad = a_bf16.shape[0]
    fpad = y_bf16.shape[1]
    out_bytes = jnp.dtype(out_dtype).itemsize
    kernel = functools.partial(_aggregate_kernel, relu=relu)
    # TODO(synk): on v5e, if the adj DMA is exposed after tiling, add
    #             pipeline_mode=pl.Buffered(3) on the adjacency BlockSpec.
    return pl.pallas_call(
        kernel,
        out_shape=jax.ShapeDtypeStruct((npad, fpad), out_dtype),
        grid=(npad // tile, npad // tile),
        in_specs=[
            pl.BlockSpec((tile, tile), lambda i, k: (i, k)),   # (A+I) bf16 stream
            pl.BlockSpec((tile, fpad), lambda i, k: (k, 0)),   # projected features
            pl.BlockSpec((tile, 1), lambda i, k: (i, 0)),      # D^{-1/2} rows
            pl.BlockSpec((1, fpad), lambda i, k: (0, 0)),      # bias, resident
        ],
        out_specs=pl.BlockSpec((tile, fpad), lambda i, k: (i, 0)),
        scratch_shapes=[pltpu.VMEM((tile, fpad), jnp.float32)],
        compiler_params=pltpu.CompilerParams(
            dimension_semantics=("parallel", "arbitrary"),
            vmem_limit_bytes=_VMEM_LIMIT),
        cost_estimate=pl.CostEstimate(
            flops=2 * npad * npad * fpad,
            transcendentals=0,
            bytes_accessed=npad * npad * 2 + npad * fpad * 2
            + npad * fpad * out_bytes),
    )(a_bf16, y_bf16, dinv, bias)


# ---------------------------------------------------------------------------
# Glue: densify edge_index into raw (A+I) (bf16, exact small ints) and the
# per-node scaling d = deg^{-1/2} — normalization itself is applied in-kernel.
# TODO(synk): the COO scatter-add densification has no clean Pallas equivalent;
#             it is done once in plain JAX.
# ---------------------------------------------------------------------------
def _build_graph(edge_index, num_nodes, npad):
    src = edge_index[0].astype(jnp.int32)   # source
    tgt = edge_index[1].astype(jnp.int32)   # target
    a = jnp.zeros((npad, npad), dtype=jnp.float32)
    a = a.at[tgt, src].add(1.0)                                 # A[target, source]
    self_loops = jnp.zeros((npad,), jnp.float32).at[:num_nodes].set(1.0)
    a = a + jnp.diag(self_loops)                                # add self loops
    deg = jnp.sum(a, axis=1)                                    # in-deg incl. self
    dinv = jnp.where(deg > 0, jax.lax.rsqrt(deg), 0.0)
    return a.astype(jnp.bfloat16), dinv.reshape(npad, 1).astype(jnp.float32)


# ---------------------------------------------------------------------------
# PieceGNN forward wrapper (mirrors the PyTorch module's semantics).
# ---------------------------------------------------------------------------
class PieceGNNPallas:
    def __init__(self, in_channels, hidden_channels, out_channels, key):
        self.in_channels = in_channels
        self.hidden_channels = hidden_channels
        self.out_channels = out_channels
        self._cpad = _round_up(in_channels, _LANE)
        self._hpad = _round_up(hidden_channels, _LANE)
        self._opad = _round_up(out_channels, _LANE)

        k1, k2, k3, k4 = jax.random.split(key, 4)
        s1 = 1.0 / jnp.sqrt(jnp.float32(in_channels))
        s2 = 1.0 / jnp.sqrt(jnp.float32(hidden_channels))
        # f32 masters (reference path)
        self.w1 = jax.random.normal(k1, (in_channels, hidden_channels),
                                    dtype=jnp.float32) * s1
        self.b1 = jax.random.normal(k3, (1, hidden_channels),
                                    dtype=jnp.float32) * 0.1
        self.w2 = jax.random.normal(k2, (hidden_channels, out_channels),
                                    dtype=jnp.float32) * s2
        self.b2 = jax.random.normal(k4, (1, out_channels),
                                    dtype=jnp.float32) * 0.1

        # lane-dense (padded to 128) copies fed to the kernels; weights bf16.
        self.w1p = (jnp.zeros((self._cpad, self._hpad), jnp.float32)
                    .at[:in_channels, :hidden_channels].set(self.w1)
                    .astype(jnp.bfloat16))
        self.b1p = (jnp.zeros((1, self._hpad), jnp.float32)
                    .at[:, :hidden_channels].set(self.b1))
        self.w2p = (jnp.zeros((self._hpad, self._opad), jnp.float32)
                    .at[:hidden_channels, :out_channels].set(self.w2)
                    .astype(jnp.bfloat16))
        self.b2p = (jnp.zeros((1, self._opad), jnp.float32)
                    .at[:, :out_channels].set(self.b2))

    def __call__(self, x_piece, edge_index_piece):
        # Degenerate branches exactly as in the PyTorch module (static shapes).
        if x_piece is None or x_piece.shape[0] == 0:
            return jnp.empty((0, self.out_channels), dtype=jnp.float32)
        if edge_index_piece.shape[1] == 0:
            return jnp.zeros((x_piece.shape[0], self.out_channels),
                             dtype=jnp.float32)

        n = x_piece.shape[0]
        npad = _round_up(n, _LANE)
        if npad > _MAX_TILE:
            npad = _round_up(npad, _MAX_TILE)
            tile = _MAX_TILE
        else:
            tile = npad

        a_bf16, dinv = _build_graph(edge_index_piece, n, npad)

        xp = (jnp.zeros((npad, self._cpad), jnp.float32)
              .at[:n, :self.in_channels].set(x_piece.astype(jnp.float32))
              .astype(jnp.bfloat16))

        # ---- layer 1: GCNConv(in -> hidden) + ReLU ----
        y1 = _project(xp, self.w1p, dinv, tile)
        h1 = _aggregate(a_bf16, y1, dinv, self.b1p,
                        relu=True, out_dtype=jnp.bfloat16, tile=tile)
        # ---- layer 2: GCNConv(hidden -> out) ----
        y2 = _project(h1, self.w2p, dinv, tile)
        out = _aggregate(a_bf16, y2, dinv, self.b2p,
                         relu=False, out_dtype=jnp.float32, tile=tile)

        # TODO(synk): batch many tiny piece-graphs into one pallas_call
        #             (stack padded adj/x on a leading grid axis) to amortize
        #             launch overhead; the module API here is per-graph.
        return out[:n, :self.out_channels]


# ---------------------------------------------------------------------------
# Pure-JAX f32 reference (same math, dense normalized adjacency).
# ---------------------------------------------------------------------------
def _reference_forward(model, x, edge_index):
    n = x.shape[0]
    a = jnp.zeros((n, n), jnp.float32).at[edge_index[1], edge_index[0]].add(1.0)
    a = a + jnp.eye(n, dtype=jnp.float32)
    deg = jnp.sum(a, axis=1)
    d = jnp.where(deg > 0, 1.0 / jnp.sqrt(deg), 0.0)
    a_hat = a * d[:, None] * d[None, :]
    h = jnp.maximum(a_hat @ (x @ model.w1) + model.b1, 0.0)
    return a_hat @ (h @ model.w2) + model.b2


if __name__ == "__main__":
    key = jax.random.PRNGKey(0)
    k_x, k_e, k_p = jax.random.split(key, 3)

    num_nodes = 8          # small "piece" graph
    in_channels = 16
    hidden_channels = 32
    out_channels = 16
    num_edges = 20

    x_piece = jax.random.normal(k_x, (num_nodes, in_channels), dtype=jnp.float32)
    edge_index = jax.random.randint(k_e, (2, num_edges), 0, num_nodes,
                                    dtype=jnp.int32)

    model = PieceGNNPallas(in_channels, hidden_channels, out_channels, k_p)

    out = model(x_piece, edge_index)
    out = jax.block_until_ready(out)

    ref = _reference_forward(model, x_piece, edge_index)
    assert out.shape == (num_nodes, out_channels)
    # bf16 MXU inputs (f32 accumulate) -> loosened tolerance vs f32 reference.
    assert jnp.allclose(out, ref, atol=5e-2, rtol=5e-2), (
        float(jnp.max(jnp.abs(out - ref))))

    print("KERNEL_OK")
</pallas_src>

<mosaic_0001>
module attributes {stable_mosaic.version = 11 : i64} {
  func.func @_project_kernel(%arg0: i32, %arg1: memref<128x128xbf16, #tpu.memory_space<vmem>>, %arg2: memref<128x128xbf16, #tpu.memory_space<vmem>>, %arg3: memref<128x1xf32, #tpu.memory_space<vmem>>, %arg4: memref<128x128xbf16, #tpu.memory_space<vmem>>) attributes {dimension_semantics = [#tpu.dimension_semantics<parallel>], iteration_bounds = array<i64: 1>, scalar_prefetch = 0 : i64, scratch_operands = 0 : i64, tpu.core_type = #tpu.core_type<tc>, window_params = [{transform_indices = @transform_0, window_bounds = array<i64: 128, 128>}, {pipeline_mode = #tpu.pipeline_mode<synchronous>, transform_indices = @transform_1, window_bounds = array<i64: 128, 128>}, {transform_indices = @transform_2, window_bounds = array<i64: 128, 1>}, {transform_indices = @transform_3, window_bounds = array<i64: 128, 128>}]} {
    %c0 = arith.constant 0 : index
    %c0_0 = arith.constant 0 : index
    %0 = vector.load %arg1[%c0, %c0_0] : memref<128x128xbf16, #tpu.memory_space<vmem>>, vector<128x128xbf16>
    %c0_1 = arith.constant 0 : index
    %c0_2 = arith.constant 0 : index
    %1 = vector.load %arg2[%c0_1, %c0_2] : memref<128x128xbf16, #tpu.memory_space<vmem>>, vector<128x128xbf16>
    %cst = arith.constant dense<0.000000e+00> : vector<128x128xf32>
    %2 = tpu.matmul %0, %1, %cst {dimension_numbers = #tpu.dot_dimension_numbers<[1], [0], [0], [1], [0, 0, 1, 1], [], []>} : vector<128x128xbf16>, vector<128x128xbf16>, vector<128x128xf32> -> vector<128x128xf32>
    %c0_3 = arith.constant 0 : index
    %c0_4 = arith.constant 0 : index
    %3 = vector.load %arg3[%c0_3, %c0_4] : memref<128x1xf32, #tpu.memory_space<vmem>>, vector<128x1xf32>
    %4 = vector.broadcast %3 : vector<128x1xf32> to vector<128x128xf32>
    %5 = arith.mulf %2, %4 : vector<128x128xf32>
    %6 = arith.truncf %5 : vector<128x128xf32> to vector<128x128xbf16>
    %c0_5 = arith.constant 0 : index
    %c0_6 = arith.constant 0 : index
    %7 = vector.load %arg4[%c0_5, %c0_6] : memref<128x128xbf16, #tpu.memory_space<vmem>>, vector<128x128xbf16>
    tpu.vector_store %arg4[%c0_5, %c0_6], %6 {strides = array<i32>} : memref<128x128xbf16, #tpu.memory_space<vmem>>, vector<128x128xbf16>,
    return
  }
  func.func @transform_0(%arg0: i32) -> (i32, i32) {
    %c0_i32 = arith.constant 0 : i32
    %c0_i32_0 = arith.constant 0 : i32
    return %arg0, %c0_i32 : i32, i32
  }
  func.func @transform_1(%arg0: i32) -> (i32, i32) {
    %c0_i32 = arith.constant 0 : i32
    %c0_i32_0 = arith.constant 0 : i32
    %c0_i32_1 = arith.constant 0 : i32
    return %c0_i32, %c0_i32_0 : i32, i32
  }
  func.func @transform_2(%arg0: i32) -> (i32, i32) {
    %c0_i32 = arith.constant 0 : i32
    %c0_i32_0 = arith.constant 0 : i32
    return %arg0, %c0_i32 : i32, i32
  }
  func.func @transform_3(%arg0: i32) -> (i32, i32) {
    %c0_i32 = arith.constant 0 : i32
    %c0_i32_0 = arith.constant 0 : i32
    return %arg0, %c0_i32 : i32, i32
  }
}

</mosaic_0001>

<llo_original>
// kernel: tpu_custom_call.1
$region0: #{tpu_custom_call.1}
  #allocation0 [shape = 'u32[]', space=smem, size = 0x4, offset = 0x4, fixed_abs, tag = 'smem constant byte address 0x4 - core index']
  #allocation1 [shape = 'u32[72,128]{1,0:T(1,128)}', space=vmem, size = 0x9000, scoped, tag = 'internal scratch']
  %s0 = inlined_call_operand.vmem [shape: bf16[128,128], index: 0, kind: input, shape index: {}]
  %s1 = inlined_call_operand.vmem [shape: bf16[128,128], index: 1, kind: input, shape index: {}]
  %s2 = inlined_call_operand.vmem [shape: f32[128,1], index: 2, kind: input, shape index: {}]
  %s3 = inlined_call_operand.hbm [shape: bf16[128,128], index: 3, kind: output, shape index: {}]
  %s4 = sld [smem:[#allocation0]]
  $region22: #{tpu_custom_call.1} parent=0
    _
  %s6 = ssub.s32 1, %s4
  %s7 = scalar_select 0, %s6, %s4
  $region1: #{tpu_custom_call.1} parent=0
    #allocation2 [shape = 'u8[32768]{0}', space=vmem, size = 0x8000, scoped, tag = 'output window, operand 0, single buffered']
    #allocation3 [shape = 's32[1]{0}', space=sflag, size = 0x4, scoped, tag = 'scoped memory for tpu_custom_call.1']
    %8 = vsyncpa [#allocation3], 0
    // Predicated region
    $region2: #{tpu_custom_call.1} parent=1 // pred_check
      _
    $region3: #{tpu_custom_call.1} parent=1 // pred_check_branch
      %10 = sbr.rel (0) target = $region5
    $region4: #{tpu_custom_call.1} parent=1 // pred_region
      _
    $region5: #{tpu_custom_call.1} parent=1 // pred_fallthru
      _
    // Predicated region
    $region6: #{tpu_custom_call.1} parent=1 // pred_check
      _
    $region7: #{tpu_custom_call.1} parent=1 // pred_check_branch
      %12 = sbr.rel (0) target = $region9
    $region8: #{tpu_custom_call.1} parent=1 // pred_region
      _
    $region9: #{tpu_custom_call.1} parent=1 // pred_fallthru
      _
    // Predicated region
    $region10: #{tpu_custom_call.1} parent=1 // pred_check
      _
    $region11: #{tpu_custom_call.1} parent=1 // pred_check_branch
      %14 = sbr.rel (0) target = $region13
    $region12: #{tpu_custom_call.1} parent=1 // pred_region
      _
    $region13: #{tpu_custom_call.1} parent=1 // pred_fallthru
      _
    %v15 = vld [vmem:[%s0] sm:$0xf]
    %v16 = vld [vmem:[%s0 + $0x4] sm:$0xf]
    %v17 = vld [vmem:[%s0 + $0x8] sm:$0xf]
    %v18 = vld [vmem:[%s0 + $0xc] sm:$0xf]
    %v19 = vld [vmem:[%s0 + $0x10] sm:$0xf]
    %v20 = vld [vmem:[%s0 + $0x14] sm:$0xf]
    %v21 = vld [vmem:[%s0 + $0x18] sm:$0xf]
    %v22 = vld [vmem:[%s0 + $0x1c] sm:$0xf]
    %v23 = vld [vmem:[%s0 + $0x20] sm:$0xf]
    %v24 = vld [vmem:[%s0 + $0x24] sm:$0xf]
    %v25 = vld [vmem:[%s0 + $0x28] sm:$0xf]
    %v26 = vld [vmem:[%s0 + $0x2c] sm:$0xf]
    %v27 = vld [vmem:[%s0 + $0x30] sm:$0xf]
    %v28 = vld [vmem:[%s0 + $0x34] sm:$0xf]
    %v29 = vld [vmem:[%s0 + $0x38] sm:$0xf]
    %v30 = vld [vmem:[%s0 + $0x3c] sm:$0xf]
    %v31 = vld [vmem:[%s1] sm:$0xf]
    %v32 = vld [vmem:[%s1 + $0x4] sm:$0xf]
    %v33 = vld [vmem:[%s1 + $0x8] sm:$0xf]
    %v34 = vld [vmem:[%s1 + $0xc] sm:$0xf]
    %v35 = vld [vmem:[%s1 + $0x10] sm:$0xf]
    %v36 = vld [vmem:[%s1 + $0x14] sm:$0xf]
    %v37 = vld [vmem:[%s1 + $0x18] sm:$0xf]
    %v38 = vld [vmem:[%s1 + $0x1c] sm:$0xf]
    %v39 = vld [vmem:[%s1 + $0x20] sm:$0xf]
    %v40 = vld [vmem:[%s1 + $0x24] sm:$0xf]
    %v41 = vld [vmem:[%s1 + $0x28] sm:$0xf]
    %v42 = vld [vmem:[%s1 + $0x2c] sm:$0xf]
    %v43 = vld [vmem:[%s1 + $0x30] sm:$0xf]
    %v44 = vld [vmem:[%s1 + $0x34] sm:$0xf]
    %v45 = vld [vmem:[%s1 + $0x38] sm:$0xf]
    %v46 = vld [vmem:[%s1 + $0x3c] sm:$0xf]
    %v63 = vunpack.c.l.b16 %v15
    %v64 = vunpack.c.l.b16 %v16
    %v65 = vunpack.c.l.b16 %v17
    %v66 = vunpack.c.l.b16 %v18
    %v67 = vunpack.c.l.b16 %v19
    %v68 = vunpack.c.l.b16 %v20
    %v69 = vunpack.c.l.b16 %v21
    %v70 = vunpack.c.l.b16 %v22
    %v71 = vunpack.c.l.b16 %v23
    %v72 = vunpack.c.l.b16 %v24
    %v73 = vunpack.c.l.b16 %v25
    %v74 = vunpack.c.l.b16 %v26
    %v75 = vunpack.c.l.b16 %v27
    %v76 = vunpack.c.l.b16 %v28
    %v77 = vunpack.c.l.b16 %v29
    %v78 = vunpack.c.l.b16 %v30
    %v79 = vpack.c.b16 %v64, %v63
    %v80 = vpack.c.b16 %v66, %v65
    %v81 = vpack.c.b16 %v68, %v67
    %v82 = vpack.c.b16 %v70, %v69
    %v83 = vpack.c.b16 %v72, %v71
    %v84 = vpack.c.b16 %v74, %v73
    %v85 = vpack.c.b16 %v76, %v75
    %v86 = vpack.c.b16 %v78, %v77
    %v111 = vunpack.c.l.b16 %v31
    %v112 = vunpack.c.l.b16 %v32
    %v113 = vunpack.c.l.b16 %v33
    %v114 = vunpack.c.l.b16 %v34
    %v115 = vunpack.c.l.b16 %v35
    %v116 = vunpack.c.l.b16 %v36
    %v117 = vunpack.c.l.b16 %v37
    %v118 = vunpack.c.l.b16 %v38
    %v119 = vunpack.c.l.b16 %v39
    %v120 = vunpack.c.l.b16 %v40
    %v121 = vunpack.c.l.b16 %v41
    %v122 = vunpack.c.l.b16 %v42
    %v123 = vunpack.c.l.b16 %v43
    %v124 = vunpack.c.l.b16 %v44
    %v125 = vunpack.c.l.b16 %v45
    %v126 = vunpack.c.l.b16 %v46
    %v127 = vpack.c.b16 %v112, %v111
    %v128 = vpack.c.b16 %v114, %v113
    %v129 = vpack.c.b16 %v116, %v115
    %v130 = vpack.c.b16 %v118, %v117
    %v131 = vpack.c.b16 %v120, %v119
    %v132 = vpack.c.b16 %v122, %v121
    %v133 = vpack.c.b16 %v124, %v123
    %v134 = vpack.c.b16 %v126, %v125
    %143 = vmatpush.bf16.msra.mxu0 %v134
    %144 = vmatpush.bf16.msra.mxu0 %v133
    %145 = vmatpush.bf16.msra.mxu0 %v132
    %146 = vmatpush.bf16.msra.mxu0 %v131
    %147 = vmatpush.bf16.msra.mxu0 %v130
    %148 = vmatpush.bf16.msra.mxu0 %v129
    %149 = vmatpush.bf16.msra.mxu0 %v128
    %150 = vmatpush.bf16.msra.mxu0 %v127
    %151 = vmatmul.bf16.gmra.mxu0 %v79
    %v152 = vpop.f32.mrf.mxu0
    %v153 = vadd.f32 0.0, %v152
    %v154 = vpop.f32.mrf.mxu0
    %v155 = vadd.f32 0.0, %v154
    %156 = vmatmul.bf16.gmra.mxu0 %v80
    %v157 = vpop.f32.mrf.mxu0
    %v158 = vadd.f32 0.0, %v157
    %v159 = vpop.f32.mrf.mxu0
    %v160 = vadd.f32 0.0, %v159
    %161 = vmatmul.bf16.gmra.mxu0 %v81
    %v162 = vpop.f32.mrf.mxu0
    %v163 = vadd.f32 0.0, %v162
    %v164 = vpop.f32.mrf.mxu0
    %v165 = vadd.f32 0.0, %v164
    %166 = vmatmul.bf16.gmra.mxu0 %v82
    %v167 = vpop.f32.mrf.mxu0
    %v168 = vadd.f32 0.0, %v167
    %v169 = vpop.f32.mrf.mxu0
    %v170 = vadd.f32 0.0, %v169
    %171 = vmatmul.bf16.gmra.mxu0 %v83
    %v172 = vpop.f32.mrf.mxu0
    %v173 = vadd.f32 0.0, %v172
    %v174 = vpop.f32.mrf.mxu0
    %v175 = vadd.f32 0.0, %v174
    %176 = vmatmul.bf16.gmra.mxu0 %v84
    %v177 = vpop.f32.mrf.mxu0
    %v178 = vadd.f32 0.0, %v177
    %v179 = vpop.f32.mrf.mxu0
    %v180 = vadd.f32 0.0, %v179
    %181 = vmatmul.bf16.gmra.mxu0 %v85
    %v182 = vpop.f32.mrf.mxu0
    %v183 = vadd.f32 0.0, %v182
    %v184 = vpop.f32.mrf.mxu0
    %v185 = vadd.f32 0.0, %v184
    %186 = vmatmul.bf16.gmra.mxu0 %v86
    %v187 = vpop.f32.mrf.mxu0
    %v188 = vadd.f32 0.0, %v187
    %v189 = vpop.f32.mrf.mxu0
    %v190 = vadd.f32 0.0, %v189
    %191 = vdwg.mxu0
    %v192 = vld [vmem:[%s2] sm:$0xff]
    %v193 = vld [vmem:[%s2 + $0x8] sm:$0xff]
    %v194 = vld [vmem:[%s2 + $0x10] sm:$0xff]
    %v195 = vld [vmem:[%s2 + $0x18] sm:$0xff]
    %v196 = vld [vmem:[%s2 + $0x20] sm:$0xff]
    %v197 = vld [vmem:[%s2 + $0x28] sm:$0xff]
    %v198 = vld [vmem:[%s2 + $0x30] sm:$0xff]
    %v199 = vld [vmem:[%s2 + $0x38] sm:$0xff]
    %v200 = vld [vmem:[%s2 + $0x40] sm:$0xff]
    %v201 = vld [vmem:[%s2 + $0x48] sm:$0xff]
    %v202 = vld [vmem:[%s2 + $0x50] sm:$0xff]
    %v203 = vld [vmem:[%s2 + $0x58] sm:$0xff]
    %v204 = vld [vmem:[%s2 + $0x60] sm:$0xff]
    %v205 = vld [vmem:[%s2 + $0x68] sm:$0xff]
    %v206 = vld [vmem:[%s2 + $0x70] sm:$0xff]
    %v207 = vld [vmem:[%s2 + $0x78] sm:$0xff]
    %209 = vset.pattern.permute.xlu0 0
    %210 = vperm.xlu0 %209, %v192
    %v211 = vpop.permute.xlu0 %210
    %214 = vset.pattern.permute.xlu0 0
    %215 = vperm.xlu0 %214, %v193
    %v216 = vpop.permute.xlu0 %215
    %219 = vset.pattern.permute.xlu0 0
    %220 = vperm.xlu0 %219, %v194
    %v221 = vpop.permute.xlu0 %220
    %224 = vset.pattern.permute.xlu0 0
    %225 = vperm.xlu0 %224, %v195
    %v226 = vpop.permute.xlu0 %225
    %229 = vset.pattern.permute.xlu0 0
    %230 = vperm.xlu0 %229, %v196
    %v231 = vpop.permute.xlu0 %230
    %234 = vset.pattern.permute.xlu0 0
    %235 = vperm.xlu0 %234, %v197
    %v236 = vpop.permute.xlu0 %235
    %239 = vset.pattern.permute.xlu0 0
    %240 = vperm.xlu0 %239, %v198
    %v241 = vpop.permute.xlu0 %240
    %244 = vset.pattern.permute.xlu0 0
    %245 = vperm.xlu0 %244, %v199
    %v246 = vpop.permute.xlu0 %245
    %249 = vset.pattern.permute.xlu0 0
    %250 = vperm.xlu0 %249, %v200
    %v251 = vpop.permute.xlu0 %250
    %254 = vset.pattern.permute.xlu0 0
    %255 = vperm.xlu0 %254, %v201
    %v256 = vpop.permute.xlu0 %255
    %259 = vset.pattern.permute.xlu0 0
    %260 = vperm.xlu0 %259, %v202
    %v261 = vpop.permute.xlu0 %260
    %264 = vset.pattern.permute.xlu0 0
    %265 = vperm.xlu0 %264, %v203
    %v266 = vpop.permute.xlu0 %265
    %269 = vset.pattern.permute.xlu0 0
    %270 = vperm.xlu0 %269, %v204
    %v271 = vpop.permute.xlu0 %270
    %274 = vset.pattern.permute.xlu0 0
    %275 = vperm.xlu0 %274, %v205
    %v276 = vpop.permute.xlu0 %275
    %279 = vset.pattern.permute.xlu0 0
    %280 = vperm.xlu0 %279, %v206
    %v281 = vpop.permute.xlu0 %280
    %284 = vset.pattern.permute.xlu0 0
    %285 = vperm.xlu0 %284, %v207
    %v286 = vpop.permute.xlu0 %285
    %v288 = vmul.f32 %v153, %v211
    %v289 = vmul.f32 %v155, %v216
    %v290 = vmul.f32 %v158, %v221
    %v291 = vmul.f32 %v160, %v226
    %v292 = vmul.f32 %v163, %v231
    %v293 = vmul.f32 %v165, %v236
    %v294 = vmul.f32 %v168, %v241
    %v295 = vmul.f32 %v170, %v246
    %v296 = vmul.f32 %v173, %v251
    %v297 = vmul.f32 %v175, %v256
    %v298 = vmul.f32 %v178, %v261
    %v299 = vmul.f32 %v180, %v266
    %v300 = vmul.f32 %v183, %v271
    %v301 = vmul.f32 %v185, %v276
    %v302 = vmul.f32 %v188, %v281
    %v303 = vmul.f32 %v190, %v286
    %v304 = vpack.c.bf16 %v288, %v288
    %v305 = vpack.c.bf16 %v289, %v289
    %v306 = vpack.c.bf16 %v290, %v290
    %v307 = vpack.c.bf16 %v291, %v291
    %v308 = vpack.c.bf16 %v292, %v292
    %v309 = vpack.c.bf16 %v293, %v293
    %v310 = vpack.c.bf16 %v294, %v294
    %v311 = vpack.c.bf16 %v295, %v295
    %v312 = vpack.c.bf16 %v296, %v296
    %v313 = vpack.c.bf16 %v297, %v297
    %v314 = vpack.c.bf16 %v298, %v298
    %v315 = vpack.c.bf16 %v299, %v299
    %v316 = vpack.c.bf16 %v300, %v300
    %v317 = vpack.c.bf16 %v301, %v301
    %v318 = vpack.c.bf16 %v302, %v302
    %v319 = vpack.c.bf16 %v303, %v303
    %320 = vst [vmem:[#allocation2] sm:$0xf] %v304
    %321 = vst [vmem:[#allocation2 + $0x4] sm:$0xf] %v305
    %322 = vst [vmem:[#allocation2 + $0x8] sm:$0xf] %v306
    %323 = vst [vmem:[#allocation2 + $0xc] sm:$0xf] %v307
    %324 = vst [vmem:[#allocation2 + $0x10] sm:$0xf] %v308
    %325 = vst [vmem:[#allocation2 + $0x14] sm:$0xf] %v309
    %326 = vst [vmem:[#allocation2 + $0x18] sm:$0xf] %v310
    %327 = vst [vmem:[#allocation2 + $0x1c] sm:$0xf] %v311
    %328 = vst [vmem:[#allocation2 + $0x20] sm:$0xf] %v312
    %329 = vst [vmem:[#allocation2 + $0x24] sm:$0xf] %v313
    %330 = vst [vmem:[#allocation2 + $0x28] sm:$0xf] %v314
    %331 = vst [vmem:[#allocation2 + $0x2c] sm:$0xf] %v315
    %332 = vst [vmem:[#allocation2 + $0x30] sm:$0xf] %v316
    %333 = vst [vmem:[#allocation2 + $0x34] sm:$0xf] %v317
    %334 = vst [vmem:[#allocation2 + $0x38] sm:$0xf] %v318
    %335 = vst [vmem:[#allocation2 + $0x3c] sm:$0xf] %v319
    // Predicated region
    $region14: #{tpu_custom_call.1} parent=1 // pred_check
      _
    $region15: #{tpu_custom_call.1} parent=1 // pred_check_branch
      %337 = sbr.rel (0) target = $region17
    $region16: #{tpu_custom_call.1} parent=1 // pred_region
      %339 = vsyncadd [#allocation3], 0
      %s340 = sshll.u32 [#allocation2], 4
      %s341 = int_to_ptr.vmem [resolvable:$true] %s340
      %s342 = sshll.u32 %s3, 4
      %s343 = int_to_ptr.hbm [resolvable:$true] %s342
      %348 = dma.vmem_to_hbm [thread:$0]  %s341, 1024, %s343, [#allocation3], 64, 64, 4
    $region17: #{tpu_custom_call.1} parent=1 // pred_fallthru
      _
    // Predicated region
    $region18: #{tpu_custom_call.1} parent=1 // pred_check
      _
    $region19: #{tpu_custom_call.1} parent=1 // pred_check_branch
      %350 = sbr.rel (0) target = $region21
    $region20: #{tpu_custom_call.1} parent=1 // pred_region
      %352 = dma.done [#allocation3], 1024
    $region21: #{tpu_custom_call.1} parent=1 // pred_fallthru
      _
    %353 = vsyncpa [#allocation3], 1

</llo_original>
